<compile_context>
chip_gen: v6e
topology: v6e:2x2x1
jax: 0.10.0
libtpu: 0.0.40
codegen_flags: <defaults>
</compile_context>

<pallas_src>
import math

import jax
import jax.numpy as jnp
from jax.experimental import pallas as pl
from jax.experimental.pallas import tpu as pltpu


_LANE = 128      # lane width: last dim of every VMEM tile is a multiple of this
_SUBLANE = 8     # f32 sublane granularity for the second-to-last dim


def _round_up(x, m):
    return ((x + m - 1) // m) * m


def _mlp_kernel(x_ref, w1_ref, b1_ref, w2_ref, b2_ref, o_ref):
    # x_ref:  (tile_m, in_p)     compute dtype (f32 or bf16)
    # w1_ref: (in_p, emb_p)      compute dtype     (resident across grid)
    # b1_ref: (1, emb_p)         f32
    # w2_ref: (emb_p, out_p)     compute dtype     (resident across grid)
    # b2_ref: (1, out_p)         f32
    # o_ref:  (tile_m, out_p)    f32 (lane-dense: out_p % 128 == 0)
    h = jnp.dot(x_ref[...], w1_ref[...], preferred_element_type=jnp.float32)
    h = jnp.maximum(h + b1_ref[...], 0.0)        # bias + ReLU in f32 (v5e VPU has no bf16)
    # Dropout(p=0) is the identity -> nothing to do.
    h = h.astype(w2_ref.dtype)                   # feed second MXU pass at compute dtype
    y = jnp.dot(h, w2_ref[...], preferred_element_type=jnp.float32)
    o_ref[...] = (y + b2_ref[...]).astype(o_ref.dtype)


def mlp_plain_forward(x, w1_t, b1, w2_t, b2, *, tile_m=256,
                      compute_dtype=jnp.float32):
    """MLP_Plain forward.

    x:    [M, input_size]
    w1_t: [input_size, embedding_size]   (PyTorch Linear1.weight transposed)
    b1:   [embedding_size]
    w2_t: [embedding_size, output_size]  (PyTorch Linear2.weight transposed)
    b2:   [output_size]
    """
    M, in_size = x.shape
    emb_size = w1_t.shape[1]
    out_size = w2_t.shape[1]
    cdt = jnp.dtype(compute_dtype)

    # ---- pad every feature dim to a lane-dense multiple of 128 -------------
    in_p = _round_up(in_size, _LANE)
    emb_p = _round_up(emb_size, _LANE)
    out_p = _round_up(out_size, _LANE)

    # ---- pick an MXU-friendly M tile, pad the batch to match ---------------
    m8 = _round_up(max(M, 1), _SUBLANE)
    tile_m = _round_up(min(tile_m, m8), _SUBLANE)
    M_p = _round_up(m8, tile_m)
    grid_m = M_p // tile_m

    # Zero padding is exact: padded x columns hit zero W1 rows, padded hidden
    # columns have zero bias and zero W2 rows, padded output columns/rows are
    # sliced off below.
    xp = jnp.zeros((M_p, in_p), cdt).at[:M, :in_size].set(x.astype(cdt))
    w1p = jnp.zeros((in_p, emb_p), cdt).at[:in_size, :emb_size].set(w1_t.astype(cdt))
    w2p = jnp.zeros((emb_p, out_p), cdt).at[:emb_size, :out_size].set(w2_t.astype(cdt))
    b1p = jnp.zeros((1, emb_p), jnp.float32).at[0, :emb_size].set(
        b1.reshape(-1).astype(jnp.float32))
    b2p = jnp.zeros((1, out_p), jnp.float32).at[0, :out_size].set(
        b2.reshape(-1).astype(jnp.float32))

    # ---- scheduler hint ------------------------------------------------------
    flops = 2 * M_p * (in_p * emb_p + emb_p * out_p)
    bytes_accessed = (xp.size * xp.dtype.itemsize
                      + w1p.size * w1p.dtype.itemsize
                      + w2p.size * w2p.dtype.itemsize
                      + b1p.size * 4 + b2p.size * 4
                      + M_p * out_p * 4)
    cost = pl.CostEstimate(flops=int(flops), transcendentals=0,
                           bytes_accessed=int(bytes_accessed))

    # ---- VMEM budget: only raise the scoped limit when actually needed ------
    itm = cdt.itemsize
    vmem_est = (2 * tile_m * in_p * itm                       # x, double-buffered
                + 2 * (in_p * emb_p + emb_p * out_p) * itm    # resident weights
                + 2 * tile_m * out_p * 4                      # out, double-buffered
                + tile_m * emb_p * 4)                         # live f32 intermediate
    cp_kwargs = dict(dimension_semantics=("parallel",))
    if vmem_est > 32 * 1024 * 1024:
        # TODO(synk): on v7x (64 MiB physical VMEM) prefer single-buffering the
        # resident weights / chunking emb_size instead of just raising the limit.
        cp_kwargs["vmem_limit_bytes"] = min(int(vmem_est * 5 // 4), 100 * 1024 * 1024)

    out_padded = pl.pallas_call(
        _mlp_kernel,
        out_shape=jax.ShapeDtypeStruct((M_p, out_p), jnp.float32),
        grid_spec=pltpu.PrefetchScalarGridSpec(
            num_scalar_prefetch=0,
            grid=(grid_m,),
            in_specs=[
                pl.BlockSpec((tile_m, in_p), lambda i: (i, 0)),    # x tile
                pl.BlockSpec((in_p, emb_p), lambda i: (0, 0)),     # W1^T (resident)
                pl.BlockSpec((1, emb_p), lambda i: (0, 0)),        # b1
                pl.BlockSpec((emb_p, out_p), lambda i: (0, 0)),    # W2^T (resident)
                pl.BlockSpec((1, out_p), lambda i: (0, 0)),        # b2
            ],
            out_specs=pl.BlockSpec((tile_m, out_p), lambda i: (i, 0)),
        ),
        compiler_params=pltpu.CompilerParams(**cp_kwargs),
        cost_estimate=cost,
    )(xp, w1p, b1p, w2p, b2p)

    return out_padded[:M, :out_size].astype(x.dtype)


def xavier_uniform(key, shape, gain):
    # shape = (out_features, in_features), like torch nn.Linear.weight
    fan_out, fan_in = shape
    a = gain * math.sqrt(6.0 / (fan_in + fan_out))
    return jax.random.uniform(key, shape, minval=-a, maxval=a, dtype=jnp.float32)


if __name__ == "__main__":
    # Small, module-consistent shapes; batch deliberately not a multiple of the
    # tile so the padding path is exercised.
    batch = 20
    input_size = 32
    embedding_size = 64
    output_size = 16

    key = jax.random.PRNGKey(0)
    kx, kw1, kb1, kw2, kb2 = jax.random.split(key, 5)

    gain = math.sqrt(2.0)  # nn.init.calculate_gain('relu')
    # PyTorch-layout weights [out, in], xavier_uniform_ with relu gain.
    w1 = xavier_uniform(kw1, (embedding_size, input_size), gain)
    w2 = xavier_uniform(kw2, (output_size, embedding_size), gain)
    # nn.Linear biases: uniform(-1/sqrt(fan_in), 1/sqrt(fan_in)) (torch default).
    b1 = jax.random.uniform(kb1, (embedding_size,), dtype=jnp.float32,
                            minval=-1.0 / math.sqrt(input_size),
                            maxval=1.0 / math.sqrt(input_size))
    b2 = jax.random.uniform(kb2, (output_size,), dtype=jnp.float32,
                            minval=-1.0 / math.sqrt(embedding_size),
                            maxval=1.0 / math.sqrt(embedding_size))
    x = jax.random.normal(kx, (batch, input_size), dtype=jnp.float32)

    # Pure-JAX reference.
    ref = jnp.maximum(x @ w1.T + b1, 0.0) @ w2.T + b2

    # f32 compute path (bit-comparable to the reference).
    out = mlp_plain_forward(x, w1.T, b1, w2.T, b2, tile_m=256)
    out = jax.block_until_ready(out)
    assert out.shape == (batch, output_size)
    assert jnp.allclose(out, ref, atol=1e-5, rtol=1e-5), "f32 mismatch vs reference"

    # bf16 MXU operands, f32 accumulation (looser tolerance).
    out_bf16 = mlp_plain_forward(x, w1.T, b1, w2.T, b2, tile_m=256,
                                 compute_dtype=jnp.bfloat16)
    out_bf16 = jax.block_until_ready(out_bf16)
    assert jnp.allclose(out_bf16, ref, atol=1e-1, rtol=1e-1), "bf16 mismatch vs reference"

    print("KERNEL_OK")
</pallas_src>

<mosaic_0001>
module attributes {stable_mosaic.version = 11 : i64} {
  func.func @_mlp_kernel(%arg0: i32, %arg1: memref<24x128xf32, #tpu.memory_space<vmem>>, %arg2: memref<128x128xf32, #tpu.memory_space<vmem>>, %arg3: memref<1x128xf32, #tpu.memory_space<vmem>>, %arg4: memref<128x128xf32, #tpu.memory_space<vmem>>, %arg5: memref<1x128xf32, #tpu.memory_space<vmem>>, %arg6: memref<24x128xf32, #tpu.memory_space<vmem>>) attributes {dimension_semantics = [#tpu.dimension_semantics<parallel>], iteration_bounds = array<i64: 1>, scalar_prefetch = 0 : i64, scratch_operands = 0 : i64, tpu.core_type = #tpu.core_type<tc>, window_params = [{transform_indices = @transform_0, window_bounds = array<i64: 24, 128>}, {pipeline_mode = #tpu.pipeline_mode<synchronous>, transform_indices = @transform_1, window_bounds = array<i64: 128, 128>}, {pipeline_mode = #tpu.pipeline_mode<synchronous>, transform_indices = @transform_2, window_bounds = array<i64: 1, 128>}, {pipeline_mode = #tpu.pipeline_mode<synchronous>, transform_indices = @transform_3, window_bounds = array<i64: 128, 128>}, {pipeline_mode = #tpu.pipeline_mode<synchronous>, transform_indices = @transform_4, window_bounds = array<i64: 1, 128>}, {transform_indices = @transform_5, window_bounds = array<i64: 24, 128>}]} {
    %c0 = arith.constant 0 : index
    %c0_0 = arith.constant 0 : index
    %0 = vector.load %arg1[%c0, %c0_0] : memref<24x128xf32, #tpu.memory_space<vmem>>, vector<24x128xf32>
    %c0_1 = arith.constant 0 : index
    %c0_2 = arith.constant 0 : index
    %1 = vector.load %arg2[%c0_1, %c0_2] : memref<128x128xf32, #tpu.memory_space<vmem>>, vector<128x128xf32>
    %cst = arith.constant dense<0.000000e+00> : vector<24x128xf32>
    %2 = tpu.matmul %0, %1, %cst {dimension_numbers = #tpu.dot_dimension_numbers<[1], [0], [0], [1], [0, 0, 1, 1], [], []>} : vector<24x128xf32>, vector<128x128xf32>, vector<24x128xf32> -> vector<24x128xf32>
    %c0_3 = arith.constant 0 : index
    %c0_4 = arith.constant 0 : index
    %3 = vector.load %arg3[%c0_3, %c0_4] : memref<1x128xf32, #tpu.memory_space<vmem>>, vector<1x128xf32>
    %4 = vector.broadcast %3 : vector<1x128xf32> to vector<24x128xf32>
    %5 = arith.addf %2, %4 : vector<24x128xf32>
    %cst_5 = arith.constant 0.000000e+00 : f32
    %6 = vector.broadcast %cst_5 : f32 to vector<24x128xf32>
    %7 = arith.maximumf %5, %6 : vector<24x128xf32>
    %c0_6 = arith.constant 0 : index
    %c0_7 = arith.constant 0 : index
    %8 = vector.load %arg4[%c0_6, %c0_7] : memref<128x128xf32, #tpu.memory_space<vmem>>, vector<128x128xf32>
    %cst_8 = arith.constant dense<0.000000e+00> : vector<24x128xf32>
    %9 = tpu.matmul %7, %8, %cst_8 {dimension_numbers = #tpu.dot_dimension_numbers<[1], [0], [0], [1], [0, 0, 1, 1], [], []>} : vector<24x128xf32>, vector<128x128xf32>, vector<24x128xf32> -> vector<24x128xf32>
    %c0_9 = arith.constant 0 : index
    %c0_10 = arith.constant 0 : index
    %10 = vector.load %arg5[%c0_9, %c0_10] : memref<1x128xf32, #tpu.memory_space<vmem>>, vector<1x128xf32>
    %11 = vector.broadcast %10 : vector<1x128xf32> to vector<24x128xf32>
    %12 = arith.addf %9, %11 : vector<24x128xf32>
    %c0_11 = arith.constant 0 : index
    %c0_12 = arith.constant 0 : index
    %13 = vector.load %arg6[%c0_11, %c0_12] : memref<24x128xf32, #tpu.memory_space<vmem>>, vector<24x128xf32>
    tpu.vector_store %arg6[%c0_11, %c0_12], %12 {strides = array<i32>} : memref<24x128xf32, #tpu.memory_space<vmem>>, vector<24x128xf32>,
    return
  }
  func.func @transform_0(%arg0: i32) -> (i32, i32) {
    %c0_i32 = arith.constant 0 : i32
    %c0_i32_0 = arith.constant 0 : i32
    return %arg0, %c0_i32 : i32, i32
  }
  func.func @transform_1(%arg0: i32) -> (i32, i32) {
    %c0_i32 = arith.constant 0 : i32
    %c0_i32_0 = arith.constant 0 : i32
    %c0_i32_1 = arith.constant 0 : i32
    return %c0_i32, %c0_i32_0 : i32, i32
  }
  func.func @transform_2(%arg0: i32) -> (i32, i32) {
    %c0_i32 = arith.constant 0 : i32
    %c0_i32_0 = arith.constant 0 : i32
    %c0_i32_1 = arith.constant 0 : i32
    return %c0_i32, %c0_i32_0 : i32, i32
  }
  func.func @transform_3(%arg0: i32) -> (i32, i32) {
    %c0_i32 = arith.constant 0 : i32
    %c0_i32_0 = arith.constant 0 : i32
    %c0_i32_1 = arith.constant 0 : i32
    return %c0_i32, %c0_i32_0 : i32, i32
  }
  func.func @transform_4(%arg0: i32) -> (i32, i32) {
    %c0_i32 = arith.constant 0 : i32
    %c0_i32_0 = arith.constant 0 : i32
    %c0_i32_1 = arith.constant 0 : i32
    return %c0_i32, %c0_i32_0 : i32, i32
  }
  func.func @transform_5(%arg0: i32) -> (i32, i32) {
    %c0_i32 = arith.constant 0 : i32
    %c0_i32_0 = arith.constant 0 : i32
    return %arg0, %c0_i32 : i32, i32
  }
}

</mosaic_0001>

<llo_original>
// kernel: tpu_custom_call.1
$region0: #{tpu_custom_call.1}
  #allocation0 [shape = 'u32[]', space=smem, size = 0x4, offset = 0x4, fixed_abs, tag = 'smem constant byte address 0x4 - core index']
  #allocation1 [shape = 'u32[144,128]{1,0:T(1,128)}', space=vmem, size = 0x12000, scoped, tag = 'internal scratch']
  %s0 = inlined_call_operand.hbm [shape: f32[24,128], index: 0, kind: input, shape index: {}]
  %s1 = inlined_call_operand.hbm [shape: f32[128,128], index: 1, kind: input, shape index: {}]
  %s2 = inlined_call_operand.vmem [shape: f32[1,128], index: 2, kind: input, shape index: {}]
  %s3 = inlined_call_operand.hbm [shape: f32[128,128], index: 3, kind: input, shape index: {}]
  %s4 = inlined_call_operand.vmem [shape: f32[1,128], index: 4, kind: input, shape index: {}]
  %s5 = inlined_call_operand.hbm [shape: f32[24,128], index: 5, kind: output, shape index: {}]
  %s6 = sld [smem:[#allocation0]]
  $region42: #{tpu_custom_call.1} parent=0
    _
  %s8 = ssub.s32 1, %s6
  %s9 = scalar_select 0, %s8, %s6
  $region1: #{tpu_custom_call.1} parent=0
    #allocation2 [shape = 'u8[12288]{0}', space=vmem, size = 0x3000, scoped, tag = 'input window, operand 0, single buffered']
    #allocation3 [shape = 's32[1]{0}', space=sflag, size = 0x4, scoped, tag = 'scoped memory for tpu_custom_call.1']
    #allocation4 [shape = 's32[1]{0}', space=sflag, size = 0x4, scoped, tag = 'scoped memory for tpu_custom_call.1']
    #allocation5 [shape = 'u8[65536]{0}', space=vmem, size = 0x10000, scoped, tag = 'input window, operand 1, single buffered']
    #allocation6 [shape = 's32[1]{0}', space=sflag, size = 0x4, scoped, tag = 'scoped memory for tpu_custom_call.1']
    #allocation7 [shape = 'u8[65536]{0}', space=vmem, size = 0x10000, scoped, tag = 'input window, operand 3, single buffered']
    #allocation8 [shape = 'u8[12288]{0}', space=vmem, size = 0x3000, scoped, tag = 'output window, operand 0, single buffered']
    %10 = vsyncpa [#allocation3], 0
    %11 = vsyncpa [#allocation6], 0
    %12 = vsyncpa [#allocation4], 0
    // Predicated region
    $region2: #{tpu_custom_call.1} parent=1 // pred_check
      _
    $region3: #{tpu_custom_call.1} parent=1 // pred_check_branch
      %14 = sbr.rel (0) target = $region5
    $region4: #{tpu_custom_call.1} parent=1 // pred_region
      %s16 = ssub.s32 384, 384
      %17 = vsyncadd [#allocation3], %s16
      %s18 = sshll.u32 [#allocation2], 4
      %s19 = int_to_ptr.vmem [resolvable:$true] %s18
      %24 = dma.hbm_to_vmem [thread:$0]  %s0, 384, %s19, [#allocation3], 128, 128, 8
    $region5: #{tpu_custom_call.1} parent=1 // pred_fallthru
      _
    // Predicated region
    $region6: #{tpu_custom_call.1} parent=1 // pred_check
      _
    $region7: #{tpu_custom_call.1} parent=1 // pred_check_branch
      %26 = sbr.rel (0) target = $region9
    $region8: #{tpu_custom_call.1} parent=1 // pred_region
      %s28 = ssub.s32 2048, 2048
      %29 = vsyncadd [#allocation6], %s28
      %s30 = sshll.u32 [#allocation5], 4
      %s31 = int_to_ptr.vmem [resolvable:$true] %s30
      %36 = dma.hbm_to_vmem [thread:$0]  %s1, 2048, %s31, [#allocation6], 128, 128, 8
    $region9: #{tpu_custom_call.1} parent=1 // pred_fallthru
      _
    // Predicated region
    $region10: #{tpu_custom_call.1} parent=1 // pred_check
      _
    $region11: #{tpu_custom_call.1} parent=1 // pred_check_branch
      %38 = sbr.rel (0) target = $region13
    $region12: #{tpu_custom_call.1} parent=1 // pred_region
      _
    $region13: #{tpu_custom_call.1} parent=1 // pred_fallthru
      _
    // Predicated region
    $region14: #{tpu_custom_call.1} parent=1 // pred_check
      _
    $region15: #{tpu_custom_call.1} parent=1 // pred_check_branch
      %40 = sbr.rel (0) target = $region17
    $region16: #{tpu_custom_call.1} parent=1 // pred_region
      %s42 = ssub.s32 2048, 2048
      %43 = vsyncadd [#allocation6], %s42
      %s44 = sshll.u32 [#allocation7], 4
      %s45 = int_to_ptr.vmem [resolvable:$true] %s44
      %50 = dma.hbm_to_vmem [thread:$0]  %s3, 2048, %s45, [#allocation6], 128, 128, 8
    $region17: #{tpu_custom_call.1} parent=1 // pred_fallthru
      _
    // Predicated region
    $region18: #{tpu_custom_call.1} parent=1 // pred_check
      _
    $region19: #{tpu_custom_call.1} parent=1 // pred_check_branch
      %52 = sbr.rel (0) target = $region21
    $region20: #{tpu_custom_call.1} parent=1 // pred_region
      _
    $region21: #{tpu_custom_call.1} parent=1 // pred_fallthru
      _
    // Predicated region
    $region22: #{tpu_custom_call.1} parent=1 // pred_check
      _
    $region23: #{tpu_custom_call.1} parent=1 // pred_check_branch
      %54 = sbr.rel (0) target = $region25
    $region24: #{tpu_custom_call.1} parent=1 // pred_region
      %55 = dma.done [#allocation3], 384
    $region25: #{tpu_custom_call.1} parent=1 // pred_fallthru
      _
    // Predicated region
    $region26: #{tpu_custom_call.1} parent=1 // pred_check
      _
    $region27: #{tpu_custom_call.1} parent=1 // pred_check_branch
      %57 = sbr.rel (0) target = $region29
    $region28: #{tpu_custom_call.1} parent=1 // pred_region
      %58 = dma.done [#allocation6], 2048
    $region29: #{tpu_custom_call.1} parent=1 // pred_fallthru
      _
    // Predicated region
    $region30: #{tpu_custom_call.1} parent=1 // pred_check
      _
    $region31: #{tpu_custom_call.1} parent=1 // pred_check_branch
      %60 = sbr.rel (0) target = $region33
    $region32: #{tpu_custom_call.1} parent=1 // pred_region
      %61 = dma.done [#allocation6], 2048
    $region33: #{tpu_custom_call.1} parent=1 // pred_fallthru
      _
    %v62 = vld [vmem:[#allocation2] sm:$0xff]
    %v63 = vld [vmem:[#allocation2 + $0x8] sm:$0xff]
    %v64 = vld [vmem:[#allocation2 + $0x10] sm:$0xff]
    %v65 = vld [vmem:[#allocation5] sm:$0xff]
    %v66 = vld [vmem:[#allocation5 + $0x8] sm:$0xff]
    %v67 = vld [vmem:[#allocation5 + $0x10] sm:$0xff]
    %v68 = vld [vmem:[#allocation5 + $0x18] sm:$0xff]
    %v69 = vld [vmem:[#allocation5 + $0x20] sm:$0xff]
    %v70 = vld [vmem:[#allocation5 + $0x28] sm:$0xff]
    %v71 = vld [vmem:[#allocation5 + $0x30] sm:$0xff]
    %v72 = vld [vmem:[#allocation5 + $0x38] sm:$0xff]
    %v73 = vld [vmem:[#allocation5 + $0x40] sm:$0xff]
    %v74 = vld [vmem:[#allocation5 + $0x48] sm:$0xff]
    %v75 = vld [vmem:[#allocation5 + $0x50] sm:$0xff]
    %v76 = vld [vmem:[#allocation5 + $0x58] sm:$0xff]
    %v77 = vld [vmem:[#allocation5 + $0x60] sm:$0xff]
    %v78 = vld [vmem:[#allocation5 + $0x68] sm:$0xff]
    %v79 = vld [vmem:[#allocation5 + $0x70] sm:$0xff]
    %v80 = vld [vmem:[#allocation5 + $0x78] sm:$0xff]
    %v81 = vld [vmem:[%s2] sm:$0x1]
    %v83 = vlaneseq
    %v84 = vshrl.u32 %v83, 7
    %v85 = vsub.s32 0, %v84
    %v86 = vrot.slane %v81, %v85
    %88 = vmatprep.subr.mxu0 0.0
    %89 = vmatpush1.msra.mxu0 %v80
    %90 = vmatprep.subr.mxu0 0.0
    %91 = vmatpush1.msra.mxu0 %v79
    %92 = vmatprep.subr.mxu0 0.0
    %93 = vmatpush1.msra.mxu0 %v78
    %94 = vmatprep.subr.mxu0 0.0
    %95 = vmatpush1.msra.mxu0 %v77
    %96 = vmatprep.subr.mxu0 0.0
    %97 = vmatpush1.msra.mxu0 %v76
    %98 = vmatprep.subr.mxu0 0.0
    %99 = vmatpush1.msra.mxu0 %v75
    %100 = vmatprep.subr.mxu0 0.0
    %101 = vmatpush1.msra.mxu0 %v74
    %102 = vmatprep.subr.mxu0 0.0
    %103 = vmatpush1.msra.mxu0 %v73
    %104 = vmatprep.subr.mxu0 0.0
    %105 = vmatpush1.msra.mxu0 %v72
    %106 = vmatprep.subr.mxu0 0.0
    %107 = vmatpush1.msra.mxu0 %v71
    %108 = vmatprep.subr.mxu0 0.0
    %109 = vmatpush1.msra.mxu0 %v70
    %110 = vmatprep.subr.mxu0 0.0
    %111 = vmatpush1.msra.mxu0 %v69
    %112 = vmatprep.subr.mxu0 0.0
    %113 = vmatpush1.msra.mxu0 %v68
    %114 = vmatprep.subr.mxu0 0.0
    %115 = vmatpush1.msra.mxu0 %v67
    %116 = vmatprep.subr.mxu0 0.0
    %117 = vmatpush1.msra.mxu0 %v66
    %118 = vmatprep.subr.mxu0 0.0
    %119 = vmatpush1.msra.mxu0 %v65
    %120 = vmatprep.subr.mxu0 0.0
    %121 = vmatpush2.msra.mxu0 0.0
    %122 = vmatprep.subr.mxu0 0.0
    %123 = vmatpush2.msra.mxu0 0.0
    %124 = vmatprep.subr.mxu0 0.0
    %125 = vmatpush2.msra.mxu0 0.0
    %126 = vmatprep.subr.mxu0 0.0
    %127 = vmatpush2.msra.mxu0 0.0
    %128 = vmatprep.subr.mxu0 0.0
    %129 = vmatpush2.msra.mxu0 0.0
    %130 = vmatprep.subr.mxu0 0.0
    %131 = vmatpush2.msra.mxu0 0.0
    %132 = vmatprep.subr.mxu0 0.0
    %133 = vmatpush2.msra.mxu0 0.0
    %134 = vmatprep.subr.mxu0 0.0
    %135 = vmatpush2.msra.mxu0 0.0
    %136 = vmatprep.subr.mxu0 0.0
    %137 = vmatpush2.msra.mxu0 0.0
    %138 = vmatprep.subr.mxu0 0.0
    %139 = vmatpush2.msra.mxu0 0.0
    %140 = vmatprep.subr.mxu0 0.0
    %141 = vmatpush2.msra.mxu0 0.0
    %142 = vmatprep.subr.mxu0 0.0
    %143 = vmatpush2.msra.mxu0 0.0
    %144 = vmatprep.subr.mxu0 0.0
    %145 = vmatpush2.msra.mxu0 0.0
    %146 = vmatprep.subr.mxu0 0.0
    %147 = vmatpush2.msra.mxu0 0.0
    %148 = vmatprep.subr.mxu0 0.0
    %149 = vmatpush2.msra.mxu0 0.0
    %150 = vmatprep.subr.mxu0 0.0
    %151 = vmatpush2.msra.mxu0 0.0
    %152 = vmatprep.mubr.f32.mxu0 0.0
    %153 = vmatmul.mubr.f32.gmra.mxu0 %v62
    %v154 = vpop.f32.mrf.mxu0
    %v155 = vadd.f32 %v86, %v154
    %v156 = vpop.f32.mrf.mxu0
    %157 = vmatprep.mubr.f32.mxu0 0.0
    %158 = vmatmul.mubr.f32.gmra.mxu0 %v63
    %v159 = vpop.f32.mrf.mxu0
    %v160 = vadd.f32 %v86, %v159
    %v161 = vpop.f32.mrf.mxu0
    %162 = vmatprep.mubr.f32.mxu0 0.0
    %163 = vmatmul.mubr.f32.gmra.mxu0 %v64
    %v164 = vpop.f32.mrf.mxu0
    %v165 = vadd.f32 %v86, %v164
    %v166 = vpop.f32.mrf.mxu0
    %167 = vdwg.mxu0
    %v168 = vmax.f32 %v155, 0.0
    %v169 = vmax.f32 %v160, 0.0
    %v170 = vmax.f32 %v165, 0.0
    %v171 = vld [vmem:[#allocation7] sm:$0xff]
    %v172 = vld [vmem:[#allocation7 + $0x8] sm:$0xff]
    %v173 = vld [vmem:[#allocation7 + $0x10] sm:$0xff]
    %v174 = vld [vmem:[#allocation7 + $0x18] sm:$0xff]
    %v175 = vld [vmem:[#allocation7 + $0x20] sm:$0xff]
    %v176 = vld [vmem:[#allocation7 + $0x28] sm:$0xff]
    %v177 = vld [vmem:[#allocation7 + $0x30] sm:$0xff]
    %v178 = vld [vmem:[#allocation7 + $0x38] sm:$0xff]
    %v179 = vld [vmem:[#allocation7 + $0x40] sm:$0xff]
    %v180 = vld [vmem:[#allocation7 + $0x48] sm:$0xff]
    %v181 = vld [vmem:[#allocation7 + $0x50] sm:$0xff]
    %v182 = vld [vmem:[#allocation7 + $0x58] sm:$0xff]
    %v183 = vld [vmem:[#allocation7 + $0x60] sm:$0xff]
    %v184 = vld [vmem:[#allocation7 + $0x68] sm:$0xff]
    %v185 = vld [vmem:[#allocation7 + $0x70] sm:$0xff]
    %v186 = vld [vmem:[#allocation7 + $0x78] sm:$0xff]
    %v187 = vld [vmem:[%s4] sm:$0x1]
    %v189 = vlaneseq
    %v190 = vshrl.u32 %v189, 7
    %v191 = vsub.s32 0, %v190
    %v192 = vrot.slane %v187, %v191
    %194 = vmatprep.subr.mxu0 0.0
    %195 = vmatpush1.msra.mxu0 %v186
    %196 = vmatprep.subr.mxu0 0.0
    %197 = vmatpush1.msra.mxu0 %v185
    %198 = vmatprep.subr.mxu0 0.0
    %199 = vmatpush1.msra.mxu0 %v184
    %200 = vmatprep.subr.mxu0 0.0
    %201 = vmatpush1.msra.mxu0 %v183
    %202 = vmatprep.subr.mxu0 0.0
    %203 = vmatpush1.msra.mxu0 %v182
    %204 = vmatprep.subr.mxu0 0.0
    %205 = vmatpush1.msra.mxu0 %v181
    %206 = vmatprep.subr.mxu0 0.0
    %207 = vmatpush1.msra.mxu0 %v180
    %208 = vmatprep.subr.mxu0 0.0
    %209 = vmatpush1.msra.mxu0 %v179
    %210 = vmatprep.subr.mxu0 0.0
    %211 = vmatpush1.msra.mxu0 %v178
    %212 = vmatprep.subr.mxu0 0.0
    %213 = vmatpush1.msra.mxu0 %v177
    %214 = vmatprep.subr.mxu0 0.0
    %215 = vmatpush1.msra.mxu0 %v176
    %216 = vmatprep.subr.mxu0 0.0
    %217 = vmatpush1.msra.mxu0 %v175
    %218 = vmatprep.subr.mxu0 0.0
    %219 = vmatpush1.msra.mxu0 %v174
    %220 = vmatprep.subr.mxu0 0.0
    %221 = vmatpush1.msra.mxu0 %v173
    %222 = vmatprep.subr.mxu0 0.0
    %223 = vmatpush1.msra.mxu0 %v172
    %224 = vmatprep.subr.mxu0 0.0
    %225 = vmatpush1.msra.mxu0 %v171
    %226 = vmatprep.subr.mxu0 0.0
    %227 = vmatpush2.msra.mxu0 0.0
    %228 = vmatprep.subr.mxu0 0.0
    %229 = vmatpush2.msra.mxu0 0.0
    %230 = vmatprep.subr.mxu0 0.0
    %231 = vmatpush2.msra.mxu0 0.0
    %232 = vmatprep.subr.mxu0 0.0
    %233 = vmatpush2.msra.mxu0 0.0
    %234 = vmatprep.subr.mxu0 0.0
    %235 = vmatpush2.msra.mxu0 0.0
    %236 = vmatprep.subr.mxu0 0.0
    %237 = vmatpush2.msra.mxu0 0.0
    %238 = vmatprep.subr.mxu0 0.0
    %239 = vmatpush2.msra.mxu0 0.0
    %240 = vmatprep.subr.mxu0 0.0
    %241 = vmatpush2.msra.mxu0 0.0
    %242 = vmatprep.subr.mxu0 0.0
    %243 = vmatpush2.msra.mxu0 0.0
    %244 = vmatprep.subr.mxu0 0.0
    %245 = vmatpush2.msra.mxu0 0.0
    %246 = vmatprep.subr.mxu0 0.0
    %247 = vmatpush2.msra.mxu0 0.0
    %248 = vmatprep.subr.mxu0 0.0
    %249 = vmatpush2.msra.mxu0 0.0
    %250 = vmatprep.subr.mxu0 0.0
    %251 = vmatpush2.msra.mxu0 0.0
    %252 = vmatprep.subr.mxu0 0.0
    %253 = vmatpush2.msra.mxu0 0.0
    %254 = vmatprep.subr.mxu0 0.0
    %255 = vmatpush2.msra.mxu0 0.0
    %256 = vmatprep.subr.mxu0 0.0
    %257 = vmatpush2.msra.mxu0 0.0
    %258 = vmatprep.mubr.f32.mxu0 0.0
    %259 = vmatmul.mubr.f32.gmra.mxu0 %v168
    %v260 = vpop.f32.mrf.mxu0
    %v261 = vadd.f32 %v192, %v260
    %v262 = vpop.f32.mrf.mxu0
    %263 = vmatprep.mubr.f32.mxu0 0.0
    %264 = vmatmul.mubr.f32.gmra.mxu0 %v169
    %v265 = vpop.f32.mrf.mxu0
    %v266 = vadd.f32 %v192, %v265
    %v267 = vpop.f32.mrf.mxu0
    %268 = vmatprep.mubr.f32.mxu0 0.0
    %269 = vmatmul.mubr.f32.gmra.mxu0 %v170
    %v270 = vpop.f32.mrf.mxu0
    %v271 = vadd.f32 %v192, %v270
    %v272 = vpop.f32.mrf.mxu0
    %273 = vdwg.mxu0
    %274 = vst [vmem:[#allocation8] sm:$0xff] %v261
    %275 = vst [vmem:[#allocation8 + $0x8] sm:$0xff] %v266
    %276 = vst [vmem:[#allocation8 + $0x10] sm:$0xff] %v271
    // Predicated region
    $region34: #{tpu_custom_call.1} parent=1 // pred_check
      _
    $region35: #{tpu_custom_call.1} parent=1 // pred_check_branch
      %278 = sbr.rel (0) target = $region37
    $region36: #{tpu_custom_call.1} parent=1 // pred_region
      %s280 = ssub.s32 384, 384
      %281 = vsyncadd [#allocation4], %s280
      %s282 = sshll.u32 [#allocation8], 4
      %s283 = int_to_ptr.vmem [resolvable:$true] %s282
      %288 = dma.vmem_to_hbm [thread:$0]  %s283, 384, %s5, [#allocation4], 128, 128, 8
    $region37: #{tpu_custom_call.1} parent=1 // pred_fallthru
      _
    // Predicated region
    $region38: #{tpu_custom_call.1} parent=1 // pred_check
      _
    $region39: #{tpu_custom_call.1} parent=1 // pred_check_branch
      %290 = sbr.rel (0) target = $region41
    $region40: #{tpu_custom_call.1} parent=1 // pred_region
      %291 = dma.done [#allocation4], 384
    $region41: #{tpu_custom_call.1} parent=1 // pred_fallthru
      _
    %292 = vsyncpa [#allocation3], 1
    %293 = vsyncpa [#allocation6], 1
    %294 = vsyncpa [#allocation4], 1

</llo_original>
